<compile_context>
chip_gen: v7x
topology: tpu7x:2x2x1
jax: 0.10.0
libtpu: 0.0.40
codegen_flags: <defaults>
</compile_context>

<pallas_src>
import jax
import jax.numpy as jnp
from jax.experimental import pallas as pl
from jax.experimental.pallas import tpu as pltpu

GAMMA = 2.0  # static; (1 - p)**2 implemented as an explicit square (no EUP pow)


def _make_focal_partial_kernel(k):
    """k = number of original rows packed into one lane-dense wide row."""

    def kernel(inp_ref, tgt_ref, out_ref):
        # inp_ref: (TNW, K*C) log-probs (native dtype)
        # tgt_ref: (TNW, K) int32 lane indices within the wide row (-1 = padding)
        x = inp_ref[...].astype(jnp.float32)
        t = tgt_ref[...]
        col = jax.lax.broadcasted_iota(jnp.int32, x.shape, 1)
        mask = col == t[:, 0:1]
        for r in range(1, k):  # k <= 8, static unroll; pure VPU cmp/or
            mask = jnp.logical_or(mask, col == t[:, r:r + 1])
        s = jnp.sum(jnp.where(mask, x, 0.0))          # partial sum_i x[i, t_i]
        # One aligned (8,128) block per grid step; every element holds the sum.
        out_ref[...] = jnp.broadcast_to(jnp.reshape(s, (1, 1)), out_ref.shape)

    return kernel


def focal_loss(log_probs, target):
    """log_probs: (N, C) log-probabilities (f32 or bf16); target: (N,) int class ids."""
    n, c = log_probs.shape
    itemsize = jnp.dtype(log_probs.dtype).itemsize

    # Lane packing factor: K original rows become one lane-dense wide row.
    k = min(128 // c, 8) if c <= 64 else 1
    wide_c = k * c
    lane_w = ((wide_c + 127) // 128) * 128            # VMEM lane padding of a wide row

    # Wide-row tile size: ~2 MiB of VMEM per input tile, multiple of 8 sublanes,
    # never larger than the (rounded-up) total number of wide rows.
    budget = 2 * 1024 * 1024
    tnw = budget // (lane_w * itemsize)
    tnw = max(8, min(4096, (tnw // 8) * 8))
    wide_total = pl.cdiv(n, k)
    tnw = min(tnw, ((wide_total + 7) // 8) * 8)

    num_tiles = pl.cdiv(wide_total, tnw)
    n_pad = num_tiles * tnw * k

    tgt = target.astype(jnp.int32)
    if n_pad != n:
        log_probs = jnp.pad(log_probs, ((0, n_pad - n), (0, 0)))
        tgt = jnp.pad(tgt, (0, n_pad - n), constant_values=-1)  # -1 never matches

    # Free, contiguous reshape into the lane-dense wide layout (no HBM movement).
    x_wide = log_probs.reshape(n_pad // k, wide_c)
    tgt_wide = tgt.reshape(n_pad // k, k)
    offsets = jnp.arange(k, dtype=jnp.int32) * jnp.int32(c)
    lane_tgt = jnp.where(tgt_wide >= 0, tgt_wide + offsets, -1)  # keep padding at -1

    partials = pl.pallas_call(
        _make_focal_partial_kernel(k),
        out_shape=jax.ShapeDtypeStruct((num_tiles * 8, 128), jnp.float32),
        grid=(num_tiles,),
        in_specs=[
            pl.BlockSpec((tnw, wide_c), lambda i: (i, 0)),   # streamed input tiles
            pl.BlockSpec((tnw, k), lambda i: (i, 0)),        # per-row lane targets
        ],
        out_specs=pl.BlockSpec((8, 128), lambda i: (i, 0)),  # per-tile partial block
        compiler_params=pltpu.CompilerParams(
            dimension_semantics=("parallel",),
            vmem_limit_bytes=32 * 1024 * 1024,
        ),
    )(x_wide, lane_tgt)

    # Tiny finalize in plain JAX (one exp, one square per call).
    picked_sum = jnp.sum(partials[::8, 0])                    # one value per tile
    logp = -picked_sum / jnp.float32(n)                       # NLLLoss (mean reduction)
    p = jnp.exp(-logp)
    d = 1.0 - p
    return d * d * logp                                       # gamma == 2


if __name__ == "__main__":
    key = jax.random.PRNGKey(0)
    k_logits, k_tgt = jax.random.split(key)

    N, C = 8, 32
    logits = jax.random.normal(k_logits, (N, C), dtype=jnp.float32)
    log_probs = jax.nn.log_softmax(logits, axis=-1)           # NLLLoss expects log-probs
    target = jax.random.randint(k_tgt, (N,), 0, C, dtype=jnp.int32)

    loss = focal_loss(log_probs, target)
    jax.block_until_ready(loss)

    # plain-JAX reference (same semantics as the PyTorch module)
    logp_ref = -jnp.mean(log_probs[jnp.arange(N), target])
    p_ref = jnp.exp(-logp_ref)
    ref = (1.0 - p_ref) ** GAMMA * logp_ref
    assert jnp.allclose(loss, ref, rtol=1e-5, atol=1e-5), (loss, ref)

    print("KERNEL_OK")
</pallas_src>

<mosaic_0001>
module attributes {stable_mosaic.version = 11 : i64} {
  func.func @kernel(%arg0: i32, %arg1: memref<8x128xf32, #tpu.memory_space<vmem>>, %arg2: memref<8x4xi32, #tpu.memory_space<vmem>>, %arg3: memref<8x128xf32, #tpu.memory_space<vmem>>) attributes {dimension_semantics = [#tpu.dimension_semantics<parallel>], iteration_bounds = array<i64: 1>, scalar_prefetch = 0 : i64, scratch_operands = 0 : i64, tpu.core_type = #tpu.core_type<tc>, window_params = [{transform_indices = @transform_0, window_bounds = array<i64: 8, 128>}, {transform_indices = @transform_1, window_bounds = array<i64: 8, 4>}, {transform_indices = @transform_2, window_bounds = array<i64: 8, 128>}]} {
    %c0 = arith.constant 0 : index
    %c0_0 = arith.constant 0 : index
    %0 = vector.load %arg1[%c0, %c0_0] : memref<8x128xf32, #tpu.memory_space<vmem>>, vector<8x128xf32>
    %c0_1 = arith.constant 0 : index
    %c0_2 = arith.constant 0 : index
    %1 = vector.load %arg2[%c0_1, %c0_2] : memref<8x4xi32, #tpu.memory_space<vmem>>, vector<8x4xi32>
    %2 = tpu.iota {dimensions = array<i32: 1>} : vector<8x128xi32>
    %3 = vector.extract_strided_slice %1 {offsets = [0, 0], sizes = [8, 1], strides = [1, 1]} : vector<8x4xi32> to vector<8x1xi32>
    %4 = vector.broadcast %3 : vector<8x1xi32> to vector<8x128xi32>
    %5 = arith.cmpi eq, %2, %4 : vector<8x128xi32>
    %6 = vector.extract_strided_slice %1 {offsets = [0, 1], sizes = [8, 1], strides = [1, 1]} : vector<8x4xi32> to vector<8x1xi32>
    %7 = vector.broadcast %6 : vector<8x1xi32> to vector<8x128xi32>
    %8 = arith.cmpi eq, %2, %7 : vector<8x128xi32>
    %9 = arith.ori %5, %8 : vector<8x128xi1>
    %10 = vector.extract_strided_slice %1 {offsets = [0, 2], sizes = [8, 1], strides = [1, 1]} : vector<8x4xi32> to vector<8x1xi32>
    %11 = vector.broadcast %10 : vector<8x1xi32> to vector<8x128xi32>
    %12 = arith.cmpi eq, %2, %11 : vector<8x128xi32>
    %13 = arith.ori %9, %12 : vector<8x128xi1>
    %14 = vector.extract_strided_slice %1 {offsets = [0, 3], sizes = [8, 1], strides = [1, 1]} : vector<8x4xi32> to vector<8x1xi32>
    %15 = vector.broadcast %14 : vector<8x1xi32> to vector<8x128xi32>
    %16 = arith.cmpi eq, %2, %15 : vector<8x128xi32>
    %17 = arith.ori %13, %16 : vector<8x128xi1>
    %cst = arith.constant 0.000000e+00 : f32
    %18 = vector.broadcast %cst : f32 to vector<8x128xf32>
    %19 = arith.select %17, %0, %18 : vector<8x128xi1>, vector<8x128xf32>
    %20 = vector.shape_cast %19 : vector<8x128xf32> to vector<1x8x128xf32>
    %cst_3 = arith.constant dense<0.000000e+00> : vector<1xf32>
    %21 = vector.multi_reduction <add>, %20, %cst_3 [1, 2] : vector<1x8x128xf32> to vector<1xf32>
    %22 = vector.shape_cast %21 : vector<1xf32> to vector<1x1x1xf32>
    %23 = vector.extract %22[0, 0, 0] : f32 from vector<1x1x1xf32>
    %24 = vector.broadcast %23 : f32 to vector<1x1xf32>
    %25 = vector.shape_cast %24 : vector<1x1xf32> to vector<1x1xf32>
    %26 = vector.broadcast %25 : vector<1x1xf32> to vector<8x128xf32>
    %c0_4 = arith.constant 0 : index
    %c0_5 = arith.constant 0 : index
    %27 = vector.load %arg3[%c0_4, %c0_5] : memref<8x128xf32, #tpu.memory_space<vmem>>, vector<8x128xf32>
    tpu.vector_store %arg3[%c0_4, %c0_5], %26 {strides = array<i32>} : memref<8x128xf32, #tpu.memory_space<vmem>>, vector<8x128xf32>,
    return
  }
  func.func @transform_0(%arg0: i32) -> (i32, i32) {
    %c0_i32 = arith.constant 0 : i32
    %c0_i32_0 = arith.constant 0 : i32
    return %arg0, %c0_i32 : i32, i32
  }
  func.func @transform_1(%arg0: i32) -> (i32, i32) {
    %c0_i32 = arith.constant 0 : i32
    %c0_i32_0 = arith.constant 0 : i32
    return %arg0, %c0_i32 : i32, i32
  }
  func.func @transform_2(%arg0: i32) -> (i32, i32) {
    %c0_i32 = arith.constant 0 : i32
    %c0_i32_0 = arith.constant 0 : i32
    return %arg0, %c0_i32 : i32, i32
  }
}

</mosaic_0001>

<llo_original>
// kernel: tpu_custom_call.1
$region0: #{tpu_custom_call.1}
  #allocation0 [shape = 'u32[]', space=smem, size = 0x4, offset = 0x4, fixed_abs, tag = 'smem constant byte address 0x4 - core index']
  #allocation1 [shape = 'u32[144,128]{1,0:T(1,128)}', space=vmem, size = 0x12000, scoped, tag = 'internal scratch']
  %s0 = inlined_call_operand.vmem [shape: f32[8,128], index: 0, kind: input, shape index: {}]
  %s1 = inlined_call_operand.vmem [shape: s32[8,4], index: 1, kind: input, shape index: {}]
  %s2 = inlined_call_operand.hbm [shape: f32[8,128], index: 2, kind: output, shape index: {}]
  %s3 = sld [smem:[#allocation0]]
  $region18: #{tpu_custom_call.1} parent=0
    _
  %s5 = ssub.s32 1, %s3
  %s6 = scalar_select 0, %s5, %s3
  $region1: #{tpu_custom_call.1} parent=0
    #allocation2 [shape = 'u8[4096]{0}', space=vmem, size = 0x1000, scoped, tag = 'output window, operand 0, single buffered']
    #allocation3 [shape = 's32[1]{0}', space=sflag, size = 0x4, scoped, tag = 'scoped memory for tpu_custom_call.1']
    %7 = vsyncpa [#allocation3], 0
    // Predicated region
    $region2: #{tpu_custom_call.1} parent=1 // pred_check
      _
    $region3: #{tpu_custom_call.1} parent=1 // pred_check_branch
      %9 = sbr.rel (0) target = $region5
    $region4: #{tpu_custom_call.1} parent=1 // pred_region
      _
    $region5: #{tpu_custom_call.1} parent=1 // pred_fallthru
      _
    // Predicated region
    $region6: #{tpu_custom_call.1} parent=1 // pred_check
      _
    $region7: #{tpu_custom_call.1} parent=1 // pred_check_branch
      %11 = sbr.rel (0) target = $region9
    $region8: #{tpu_custom_call.1} parent=1 // pred_region
      _
    $region9: #{tpu_custom_call.1} parent=1 // pred_fallthru
      _
    %v12 = vld [vmem:[%s0] sm:$0xff]
    %v13 = vld [vmem:[%s1] sm:$0xff]
    %v14 = vlaneseq
    %v15 = vand.u32 %v14, 127
    %16 = vset.pattern.permute.xlu0 0
    %17 = vperm.xlu0 %16, %v13
    %v18 = vpop.permute.xlu0 %17
    %vm19 = vcmp.eq.s32.totalorder %v15, %v18
    %20 = vset.pattern.permute.xlu0 1
    %21 = vperm.xlu0 %20, %v13
    %v22 = vpop.permute.xlu0 %21
    %vm23 = vcmp.eq.s32.totalorder %v15, %v22
    %vm24 = vmor %vm19, %vm23
    %25 = vset.pattern.permute.xlu0 2
    %26 = vperm.xlu0 %25, %v13
    %v27 = vpop.permute.xlu0 %26
    %vm28 = vcmp.eq.s32.totalorder %v15, %v27
    %vm29 = vmor %vm24, %vm28
    %30 = vset.pattern.permute.xlu0 3
    %31 = vperm.xlu0 %30, %v13
    %v32 = vpop.permute.xlu0 %31
    %vm33 = vcmp.eq.s32.totalorder %v15, %v32
    %vm34 = vmor %vm29, %vm33
    %v35 = vsel %vm34, %v12, 0.0
    %36 = vadd.xlane.f32.xlu0 %v35
    %v37 = vpop.xlane.xlu0 %36
    %v38 = vrot.slane %v37, 4
    %v39 = vadd.f32 %v37, %v38
    %v40 = vrot.slane %v39, 2
    %v41 = vadd.f32 %v39, %v40
    %v42 = vrot.slane %v41, 1
    %v43 = vadd.f32 %v41, %v42
    %s44 = vtos %v43
    %v45 = vstv %s44
    %46 = vst [vmem:[#allocation2] sm:$0xff] %v45
    // Predicated region
    $region10: #{tpu_custom_call.1} parent=1 // pred_check
      _
    $region11: #{tpu_custom_call.1} parent=1 // pred_check_branch
      %48 = sbr.rel (0) target = $region13
    $region12: #{tpu_custom_call.1} parent=1 // pred_region
      %s50 = ssub.s32 128, 128
      %51 = vsyncadd [#allocation3], %s50
      %s53 = sshll.u32 [#allocation2], 4
      %s54 = int_to_ptr.vmem [resolvable:$true] %s53
      %56 = dma.vmem_to_hbm [thread:$0]  %s54, 128, %s2, [#allocation3]
    $region13: #{tpu_custom_call.1} parent=1 // pred_fallthru
      _
    // Predicated region
    $region14: #{tpu_custom_call.1} parent=1 // pred_check
      _
    $region15: #{tpu_custom_call.1} parent=1 // pred_check_branch
      %58 = sbr.rel (0) target = $region17
    $region16: #{tpu_custom_call.1} parent=1 // pred_region
      %59 = dma.done [#allocation3], 128
    $region17: #{tpu_custom_call.1} parent=1 // pred_fallthru
      _
    %60 = vsyncpa [#allocation3], 1

</llo_original>
